<compile_context>
chip_gen: v7x
topology: tpu7x:2x2x1
jax: 0.10.0
libtpu: 0.0.40
codegen_flags: <defaults>
</compile_context>

<pallas_src>
import jax
import jax.numpy as jnp
import numpy as np
from jax import lax
from jax.experimental import pallas as pl
from jax.experimental.pallas import tpu as pltpu

BATCH_NUM = 20


def lstm_linear_kernel(x_ref, p_ref, b_fc_ref, out_ref, hs_ref):
    """Shapes:
         x_ref   : (T, 1)      batch-0 inputs (time-major, input_size==1 folded away)
         p_ref   : (>=H+5, 4H) packed parameters, gate order (i, f, o, g) on lanes:
                     rows 0..H-1 : W_hh fused+transposed, i/f/o columns pre-scaled by 0.5
                     row  H      : W_ih row (same packing / pre-scale)
                     row  H+1    : b_ih + b_hh row (same packing / pre-scale)
                     row  H+2    : affine scale  (0.5 on i/f/o lanes, 1.0 on g lanes)
                     row  H+3    : affine offset (0.5 on i/f/o lanes, 0.0 on g lanes)
                     row  H+4    : W_fc in lanes 0..H-1, zeros elsewhere
         b_fc_ref: (1,)        final Linear bias (SMEM scalar)
         out_ref : (T, 1)      per-timestep output for batch element 0
         hs_ref  : (T, H)      VMEM scratch holding h_t for the post-loop linear
    """
    T = x_ref.shape[0]
    H = p_ref.shape[1] // 4

    w_hh = p_ref[0:H, :]              # (H, 4H)   loop-invariant, hoisted
    w_ih = p_ref[H:H + 1, :]          # (1, 4H)
    brow = p_ref[H + 1:H + 2, :]      # (1, 4H)
    a_aff = p_ref[H + 2:H + 3, :]     # (1, 4H)
    b_aff = p_ref[H + 3:H + 4, :]     # (1, 4H)
    w_fc = p_ref[H + 4:H + 5, 0:H]    # (1, H)

    # Hoisted input + bias pre-activations for every timestep (off the chain):
    # (T,1) * (1,4H) + (1,4H) -> (T,4H).
    xb = x_ref[...] * w_ih + brow

    c = jnp.zeros((1, H), jnp.float32)
    h = jnp.zeros((1, H), jnp.float32)
    # T is tiny and static -> fully unrolled so the scheduler can overlap steps.
    for t in range(T):
        if t == 0:
            # h0 == 0: the recurrent matmul contributes nothing -> skip it.
            gates = xb[0:1, :]
        else:
            # One fused MXU matmul for all four gates: (1,H) @ (H,4H) -> (1,4H).
            gates = xb[t:t + 1, :] + jnp.dot(
                h, w_hh, preferred_element_type=jnp.float32)

        # Single EUP pass over the whole 128-lane vreg, then one per-lane affine:
        #   sigma(z) = 0.5 + 0.5*tanh(z/2)   (the /2 is baked into the i/f/o weights).
        act = a_aff * jnp.tanh(gates) + b_aff       # (1, 4H)
        i_g = act[:, 0:H]
        f_g = act[:, H:2 * H]
        o_g = act[:, 2 * H:3 * H]
        g_g = act[:, 3 * H:4 * H]

        c = f_g * c + i_g * g_g
        h = o_g * jnp.tanh(c)
        hs_ref[t:t + 1, :] = h                      # off-chain row store

    # Post-loop Linear H -> 1 for all timesteps: lane mul + cross-lane reduce
    # (no transpose, no extra MXU push), then one small store.
    hs = hs_ref[...]                                # (T, H)
    out_ref[...] = jnp.sum(hs * w_fc, axis=1, keepdims=True) + b_fc_ref[0]


def lstm_rnn_forward(x, params):
    """x: (T, BATCH_NUM) float32 -> (T,) float32 (matches PyTorch forward)."""
    T, _ = x.shape
    packed = params["packed"]
    H = packed.shape[1] // 4
    # PyTorch forward keeps only batch column 0 (narrow(1,0,1)); LSTM batch
    # elements are independent, so only column 0 is fed to the kernel.
    x0 = x[:, 0:1]                                  # (T, 1)
    out = pl.pallas_call(
        lstm_linear_kernel,
        out_shape=jax.ShapeDtypeStruct((T, 1), jnp.float32),
        in_specs=[
            pl.BlockSpec(memory_space=pltpu.MemorySpace.VMEM),  # x0
            pl.BlockSpec(memory_space=pltpu.MemorySpace.VMEM),  # packed params
            pl.BlockSpec(memory_space=pltpu.MemorySpace.SMEM),  # b_fc (scalar)
        ],
        out_specs=pl.BlockSpec(memory_space=pltpu.MemorySpace.VMEM),
        scratch_shapes=[pltpu.VMEM((T, H), jnp.float32)],       # h_t accumulator
    )(x0, packed, params["b_fc"])
    return out[:, 0]


def init_params(key, input_size=1, hidden_size=32, output_size=1):
    """Deterministic init mirroring PyTorch's uniform(-1/sqrt(H), 1/sqrt(H))."""
    H = hidden_size
    bound = 1.0 / np.sqrt(H)
    ks = jax.random.split(key, 6)
    w_ih = jax.random.uniform(ks[0], (4 * H, input_size), jnp.float32, -bound, bound)
    w_hh = jax.random.uniform(ks[1], (4 * H, H), jnp.float32, -bound, bound)
    b_ih = jax.random.uniform(ks[2], (4 * H,), jnp.float32, -bound, bound)
    b_hh = jax.random.uniform(ks[3], (4 * H,), jnp.float32, -bound, bound)
    w_fc = jax.random.uniform(ks[4], (output_size, H), jnp.float32, -bound, bound)
    b_fc = jax.random.uniform(ks[5], (output_size,), jnp.float32, -bound, bound)

    # Gate repack: PyTorch order (i, f, g, o) -> (i, f, o, g) so the three sigmoid
    # gates form a contiguous 3H slab; 4H = 128 lanes for H = 32.
    perm = np.concatenate([np.arange(0, H), np.arange(H, 2 * H),
                           np.arange(3 * H, 4 * H), np.arange(2 * H, 3 * H)])
    # sigma(z) = 0.5 + 0.5*tanh(z/2): pre-scale the i/f/o columns by 0.5 so one
    # full-vreg tanh inside the kernel covers all four gates.
    scale = jnp.concatenate([jnp.full((3 * H,), 0.5, jnp.float32),
                             jnp.ones((H,), jnp.float32)])

    w_ih_row = w_ih.reshape(4 * H)[perm][None, :] * scale[None, :]      # (1, 4H)
    b_row = ((b_ih + b_hh)[perm] * scale)[None, :]                      # (1, 4H)
    w_hh_all = jnp.transpose(w_hh[perm, :]) * scale[None, :]            # (H, 4H)
    a_aff = jnp.concatenate([jnp.full((3 * H,), 0.5, jnp.float32),
                             jnp.ones((H,), jnp.float32)])[None, :]     # (1, 4H)
    b_aff = jnp.concatenate([jnp.full((3 * H,), 0.5, jnp.float32),
                             jnp.zeros((H,), jnp.float32)])[None, :]    # (1, 4H)
    w_fc_row = jnp.concatenate([w_fc.reshape(H),
                                jnp.zeros((3 * H,), jnp.float32)])[None, :]  # (1, 4H)

    # Coalesce all parameters into one VMEM array -> one parameter DMA per call.
    rows = H + 5
    pad = (-rows) % 8
    packed = jnp.concatenate(
        [w_hh_all, w_ih_row, b_row, a_aff, b_aff, w_fc_row,
         jnp.zeros((pad, 4 * H), jnp.float32)], axis=0)                 # (40, 4H)

    return {
        "packed": packed,
        "b_fc": b_fc,                                                   # (1,)
        # raw copies for the pure-JAX reference
        "_w_ih": w_ih, "_w_hh": w_hh, "_b_ih": b_ih, "_b_hh": b_hh,
        "_w_fc": w_fc, "_b_fc": b_fc,
    }


def reference_forward(x, params):
    """Pure-JAX reference replicating PyTorch LSTM + Linear semantics (full batch)."""
    w_ih, w_hh = params["_w_ih"], params["_w_hh"]
    b = params["_b_ih"] + params["_b_hh"]
    w_fc, b_fc = params["_w_fc"], params["_b_fc"]
    H = w_hh.shape[1]
    B = x.shape[1]
    h0 = jnp.zeros((B, H), jnp.float32)
    c0 = jnp.zeros((B, H), jnp.float32)

    def step(carry, x_t):
        h, c = carry
        gates = x_t[:, None] @ w_ih.T + h @ w_hh.T + b[None, :]
        i_g = jax.nn.sigmoid(gates[:, 0:H])
        f_g = jax.nn.sigmoid(gates[:, H:2 * H])
        g_g = jnp.tanh(gates[:, 2 * H:3 * H])
        o_g = jax.nn.sigmoid(gates[:, 3 * H:4 * H])
        c_new = f_g * c + i_g * g_g
        h_new = o_g * jnp.tanh(c_new)
        return (h_new, c_new), h_new

    _, hs = lax.scan(step, (h0, c0), x)                   # (T, B, H)
    y = hs @ w_fc.T + b_fc                                # (T, B, 1)
    return y[:, 0, 0]                                     # narrow + squeeze -> (T,)


if __name__ == "__main__":
    key = jax.random.PRNGKey(0)
    k_param, k_x = jax.random.split(key)

    T, H = 8, 32
    params = init_params(k_param, input_size=1, hidden_size=H, output_size=1)
    x = jax.random.normal(k_x, (T, BATCH_NUM), jnp.float32)

    out = jax.block_until_ready(lstm_rnn_forward(x, params))
    ref = jax.block_until_ready(reference_forward(x, params))

    assert out.shape == (T,), out.shape
    np.testing.assert_allclose(np.asarray(out), np.asarray(ref), rtol=1e-5, atol=1e-5)
    print("KERNEL_OK")
</pallas_src>

<mosaic_0001>
module attributes {stable_mosaic.version = 11 : i64} {
  func.func @lstm_linear_kernel(%arg0: memref<8x1xf32, #tpu.memory_space<vmem>>, %arg1: memref<40x128xf32, #tpu.memory_space<vmem>>, %arg2: memref<1xf32, #tpu.memory_space<smem>>, %arg3: memref<8x1xf32, #tpu.memory_space<vmem>>, %arg4: memref<8x32xf32, #tpu.memory_space<vmem>>) attributes {dimension_semantics = [], scalar_prefetch = 0 : i64, scratch_operands = 1 : i64, tpu.core_type = #tpu.core_type<tc>} {
    %c0 = arith.constant 0 : index
    %c0_0 = arith.constant 0 : index
    %0 = vector.load %arg1[%c0, %c0_0] : memref<40x128xf32, #tpu.memory_space<vmem>>, vector<32x128xf32>
    %c32 = arith.constant 32 : index
    %c0_1 = arith.constant 0 : index
    %1 = vector.load %arg1[%c32, %c0_1] : memref<40x128xf32, #tpu.memory_space<vmem>>, vector<1x128xf32>
    %c33 = arith.constant 33 : index
    %c0_2 = arith.constant 0 : index
    %2 = vector.load %arg1[%c33, %c0_2] : memref<40x128xf32, #tpu.memory_space<vmem>>, vector<1x128xf32>
    %c34 = arith.constant 34 : index
    %c0_3 = arith.constant 0 : index
    %3 = vector.load %arg1[%c34, %c0_3] : memref<40x128xf32, #tpu.memory_space<vmem>>, vector<1x128xf32>
    %c35 = arith.constant 35 : index
    %c0_4 = arith.constant 0 : index
    %4 = vector.load %arg1[%c35, %c0_4] : memref<40x128xf32, #tpu.memory_space<vmem>>, vector<1x128xf32>
    %c36 = arith.constant 36 : index
    %c0_5 = arith.constant 0 : index
    %5 = vector.load %arg1[%c36, %c0_5] : memref<40x128xf32, #tpu.memory_space<vmem>>, vector<1x32xf32>
    %c0_6 = arith.constant 0 : index
    %c0_7 = arith.constant 0 : index
    %6 = vector.load %arg0[%c0_6, %c0_7] : memref<8x1xf32, #tpu.memory_space<vmem>>, vector<8x1xf32>
    %7 = vector.broadcast %6 : vector<8x1xf32> to vector<8x128xf32>
    %8 = vector.broadcast %1 : vector<1x128xf32> to vector<8x128xf32>
    %9 = arith.mulf %7, %8 : vector<8x128xf32>
    %10 = vector.broadcast %2 : vector<1x128xf32> to vector<8x128xf32>
    %11 = arith.addf %9, %10 : vector<8x128xf32>
    %cst = arith.constant 0.000000e+00 : f32
    %12 = vector.broadcast %cst : f32 to vector<1x32xf32>
    %13 = vector.extract_strided_slice %11 {offsets = [0, 0], sizes = [1, 128], strides = [1, 1]} : vector<8x128xf32> to vector<1x128xf32>
    %14 = math.tanh %13 : vector<1x128xf32>
    %15 = arith.mulf %3, %14 : vector<1x128xf32>
    %16 = arith.addf %15, %4 : vector<1x128xf32>
    %17 = vector.extract_strided_slice %16 {offsets = [0, 0], sizes = [1, 32], strides = [1, 1]} : vector<1x128xf32> to vector<1x32xf32>
    %18 = vector.extract_strided_slice %16 {offsets = [0, 32], sizes = [1, 32], strides = [1, 1]} : vector<1x128xf32> to vector<1x32xf32>
    %19 = vector.extract_strided_slice %16 {offsets = [0, 64], sizes = [1, 32], strides = [1, 1]} : vector<1x128xf32> to vector<1x32xf32>
    %20 = vector.extract_strided_slice %16 {offsets = [0, 96], sizes = [1, 32], strides = [1, 1]} : vector<1x128xf32> to vector<1x32xf32>
    %21 = arith.mulf %18, %12 : vector<1x32xf32>
    %22 = arith.mulf %17, %20 : vector<1x32xf32>
    %23 = arith.addf %21, %22 : vector<1x32xf32>
    %24 = math.tanh %23 : vector<1x32xf32>
    %25 = arith.mulf %19, %24 : vector<1x32xf32>
    %c0_8 = arith.constant 0 : index
    %c0_9 = arith.constant 0 : index
    %26 = vector.load %arg4[%c0_8, %c0_9] : memref<8x32xf32, #tpu.memory_space<vmem>>, vector<1x32xf32>
    tpu.vector_store %arg4[%c0_8, %c0_9], %25 {strides = array<i32>} : memref<8x32xf32, #tpu.memory_space<vmem>>, vector<1x32xf32>,
    %27 = vector.extract_strided_slice %11 {offsets = [1, 0], sizes = [1, 128], strides = [1, 1]} : vector<8x128xf32> to vector<1x128xf32>
    %cst_10 = arith.constant dense<0.000000e+00> : vector<1x128xf32>
    %28 = tpu.matmul %25, %0, %cst_10 {dimension_numbers = #tpu.dot_dimension_numbers<[1], [0], [0], [1], [0, 0, 1, 1], [], []>} : vector<1x32xf32>, vector<32x128xf32>, vector<1x128xf32> -> vector<1x128xf32>
    %29 = arith.addf %27, %28 : vector<1x128xf32>
    %30 = math.tanh %29 : vector<1x128xf32>
    %31 = arith.mulf %3, %30 : vector<1x128xf32>
    %32 = arith.addf %31, %4 : vector<1x128xf32>
    %33 = vector.extract_strided_slice %32 {offsets = [0, 0], sizes = [1, 32], strides = [1, 1]} : vector<1x128xf32> to vector<1x32xf32>
    %34 = vector.extract_strided_slice %32 {offsets = [0, 32], sizes = [1, 32], strides = [1, 1]} : vector<1x128xf32> to vector<1x32xf32>
    %35 = vector.extract_strided_slice %32 {offsets = [0, 64], sizes = [1, 32], strides = [1, 1]} : vector<1x128xf32> to vector<1x32xf32>
    %36 = vector.extract_strided_slice %32 {offsets = [0, 96], sizes = [1, 32], strides = [1, 1]} : vector<1x128xf32> to vector<1x32xf32>
    %37 = arith.mulf %34, %23 : vector<1x32xf32>
    %38 = arith.mulf %33, %36 : vector<1x32xf32>
    %39 = arith.addf %37, %38 : vector<1x32xf32>
    %40 = math.tanh %39 : vector<1x32xf32>
    %41 = arith.mulf %35, %40 : vector<1x32xf32>
    %c1 = arith.constant 1 : index
    %c0_11 = arith.constant 0 : index
    %42 = vector.load %arg4[%c1, %c0_11] : memref<8x32xf32, #tpu.memory_space<vmem>>, vector<1x32xf32>
    tpu.vector_store %arg4[%c1, %c0_11], %41 {strides = array<i32>} : memref<8x32xf32, #tpu.memory_space<vmem>>, vector<1x32xf32>,
    %43 = vector.extract_strided_slice %11 {offsets = [2, 0], sizes = [1, 128], strides = [1, 1]} : vector<8x128xf32> to vector<1x128xf32>
    %cst_12 = arith.constant dense<0.000000e+00> : vector<1x128xf32>
    %44 = tpu.matmul %41, %0, %cst_12 {dimension_numbers = #tpu.dot_dimension_numbers<[1], [0], [0], [1], [0, 0, 1, 1], [], []>} : vector<1x32xf32>, vector<32x128xf32>, vector<1x128xf32> -> vector<1x128xf32>
    %45 = arith.addf %43, %44 : vector<1x128xf32>
    %46 = math.tanh %45 : vector<1x128xf32>
    %47 = arith.mulf %3, %46 : vector<1x128xf32>
    %48 = arith.addf %47, %4 : vector<1x128xf32>
    %49 = vector.extract_strided_slice %48 {offsets = [0, 0], sizes = [1, 32], strides = [1, 1]} : vector<1x128xf32> to vector<1x32xf32>
    %50 = vector.extract_strided_slice %48 {offsets = [0, 32], sizes = [1, 32], strides = [1, 1]} : vector<1x128xf32> to vector<1x32xf32>
    %51 = vector.extract_strided_slice %48 {offsets = [0, 64], sizes = [1, 32], strides = [1, 1]} : vector<1x128xf32> to vector<1x32xf32>
    %52 = vector.extract_strided_slice %48 {offsets = [0, 96], sizes = [1, 32], strides = [1, 1]} : vector<1x128xf32> to vector<1x32xf32>
    %53 = arith.mulf %50, %39 : vector<1x32xf32>
    %54 = arith.mulf %49, %52 : vector<1x32xf32>
    %55 = arith.addf %53, %54 : vector<1x32xf32>
    %56 = math.tanh %55 : vector<1x32xf32>
    %57 = arith.mulf %51, %56 : vector<1x32xf32>
    %c2 = arith.constant 2 : index
    %c0_13 = arith.constant 0 : index
    %58 = vector.load %arg4[%c2, %c0_13] : memref<8x32xf32, #tpu.memory_space<vmem>>, vector<1x32xf32>
    tpu.vector_store %arg4[%c2, %c0_13], %57 {strides = array<i32>} : memref<8x32xf32, #tpu.memory_space<vmem>>, vector<1x32xf32>,
    %59 = vector.extract_strided_slice %11 {offsets = [3, 0], sizes = [1, 128], strides = [1, 1]} : vector<8x128xf32> to vector<1x128xf32>
    %cst_14 = arith.constant dense<0.000000e+00> : vector<1x128xf32>
    %60 = tpu.matmul %57, %0, %cst_14 {dimension_numbers = #tpu.dot_dimension_numbers<[1], [0], [0], [1], [0, 0, 1, 1], [], []>} : vector<1x32xf32>, vector<32x128xf32>, vector<1x128xf32> -> vector<1x128xf32>
    %61 = arith.addf %59, %60 : vector<1x128xf32>
    %62 = math.tanh %61 : vector<1x128xf32>
    %63 = arith.mulf %3, %62 : vector<1x128xf32>
    %64 = arith.addf %63, %4 : vector<1x128xf32>
    %65 = vector.extract_strided_slice %64 {offsets = [0, 0], sizes = [1, 32], strides = [1, 1]} : vector<1x128xf32> to vector<1x32xf32>
    %66 = vector.extract_strided_slice %64 {offsets = [0, 32], sizes = [1, 32], strides = [1, 1]} : vector<1x128xf32> to vector<1x32xf32>
    %67 = vector.extract_strided_slice %64 {offsets = [0, 64], sizes = [1, 32], strides = [1, 1]} : vector<1x128xf32> to vector<1x32xf32>
    %68 = vector.extract_strided_slice %64 {offsets = [0, 96], sizes = [1, 32], strides = [1, 1]} : vector<1x128xf32> to vector<1x32xf32>
    %69 = arith.mulf %66, %55 : vector<1x32xf32>
    %70 = arith.mulf %65, %68 : vector<1x32xf32>
    %71 = arith.addf %69, %70 : vector<1x32xf32>
    %72 = math.tanh %71 : vector<1x32xf32>
    %73 = arith.mulf %67, %72 : vector<1x32xf32>
    %c3 = arith.constant 3 : index
    %c0_15 = arith.constant 0 : index
    %74 = vector.load %arg4[%c3, %c0_15] : memref<8x32xf32, #tpu.memory_space<vmem>>, vector<1x32xf32>
    tpu.vector_store %arg4[%c3, %c0_15], %73 {strides = array<i32>} : memref<8x32xf32, #tpu.memory_space<vmem>>, vector<1x32xf32>,
    %75 = vector.extract_strided_slice %11 {offsets = [4, 0], sizes = [1, 128], strides = [1, 1]} : vector<8x128xf32> to vector<1x128xf32>
    %cst_16 = arith.constant dense<0.000000e+00> : vector<1x128xf32>
    %76 = tpu.matmul %73, %0, %cst_16 {dimension_numbers = #tpu.dot_dimension_numbers<[1], [0], [0], [1], [0, 0, 1, 1], [], []>} : vector<1x32xf32>, vector<32x128xf32>, vector<1x128xf32> -> vector<1x128xf32>
    %77 = arith.addf %75, %76 : vector<1x128xf32>
    %78 = math.tanh %77 : vector<1x128xf32>
    %79 = arith.mulf %3, %78 : vector<1x128xf32>
    %80 = arith.addf %79, %4 : vector<1x128xf32>
    %81 = vector.extract_strided_slice %80 {offsets = [0, 0], sizes = [1, 32], strides = [1, 1]} : vector<1x128xf32> to vector<1x32xf32>
    %82 = vector.extract_strided_slice %80 {offsets = [0, 32], sizes = [1, 32], strides = [1, 1]} : vector<1x128xf32> to vector<1x32xf32>
    %83 = vector.extract_strided_slice %80 {offsets = [0, 64], sizes = [1, 32], strides = [1, 1]} : vector<1x128xf32> to vector<1x32xf32>
    %84 = vector.extract_strided_slice %80 {offsets = [0, 96], sizes = [1, 32], strides = [1, 1]} : vector<1x128xf32> to vector<1x32xf32>
    %85 = arith.mulf %82, %71 : vector<1x32xf32>
    %86 = arith.mulf %81, %84 : vector<1x32xf32>
    %87 = arith.addf %85, %86 : vector<1x32xf32>
    %88 = math.tanh %87 : vector<1x32xf32>
    %89 = arith.mulf %83, %88 : vector<1x32xf32>
    %c4 = arith.constant 4 : index
    %c0_17 = arith.constant 0 : index
    %90 = vector.load %arg4[%c4, %c0_17] : memref<8x32xf32, #tpu.memory_space<vmem>>, vector<1x32xf32>
    tpu.vector_store %arg4[%c4, %c0_17], %89 {strides = array<i32>} : memref<8x32xf32, #tpu.memory_space<vmem>>, vector<1x32xf32>,
    %91 = vector.extract_strided_slice %11 {offsets = [5, 0], sizes = [1, 128], strides = [1, 1]} : vector<8x128xf32> to vector<1x128xf32>
    %cst_18 = arith.constant dense<0.000000e+00> : vector<1x128xf32>
    %92 = tpu.matmul %89, %0, %cst_18 {dimension_numbers = #tpu.dot_dimension_numbers<[1], [0], [0], [1], [0, 0, 1, 1], [], []>} : vector<1x32xf32>, vector<32x128xf32>, vector<1x128xf32> -> vector<1x128xf32>
    %93 = arith.addf %91, %92 : vector<1x128xf32>
    %94 = math.tanh %93 : vector<1x128xf32>
    %95 = arith.mulf %3, %94 : vector<1x128xf32>
    %96 = arith.addf %95, %4 : vector<1x128xf32>
    %97 = vector.extract_strided_slice %96 {offsets = [0, 0], sizes = [1, 32], strides = [1, 1]} : vector<1x128xf32> to vector<1x32xf32>
    %98 = vector.extract_strided_slice %96 {offsets = [0, 32], sizes = [1, 32], strides = [1, 1]} : vector<1x128xf32> to vector<1x32xf32>
    %99 = vector.extract_strided_slice %96 {offsets = [0, 64], sizes = [1, 32], strides = [1, 1]} : vector<1x128xf32> to vector<1x32xf32>
    %100 = vector.extract_strided_slice %96 {offsets = [0, 96], sizes = [1, 32], strides = [1, 1]} : vector<1x128xf32> to vector<1x32xf32>
    %101 = arith.mulf %98, %87 : vector<1x32xf32>
    %102 = arith.mulf %97, %100 : vector<1x32xf32>
    %103 = arith.addf %101, %102 : vector<1x32xf32>
    %104 = math.tanh %103 : vector<1x32xf32>
    %105 = arith.mulf %99, %104 : vector<1x32xf32>
    %c5 = arith.constant 5 : index
    %c0_19 = arith.constant 0 : index
    %106 = vector.load %arg4[%c5, %c0_19] : memref<8x32xf32, #tpu.memory_space<vmem>>, vector<1x32xf32>
    tpu.vector_store %arg4[%c5, %c0_19], %105 {strides = array<i32>} : memref<8x32xf32, #tpu.memory_space<vmem>>, vector<1x32xf32>,
    %107 = vector.extract_strided_slice %11 {offsets = [6, 0], sizes = [1, 128], strides = [1, 1]} : vector<8x128xf32> to vector<1x128xf32>
    %cst_20 = arith.constant dense<0.000000e+00> : vector<1x128xf32>
    %108 = tpu.matmul %105, %0, %cst_20 {dimension_numbers = #tpu.dot_dimension_numbers<[1], [0], [0], [1], [0, 0, 1, 1], [], []>} : vector<1x32xf32>, vector<32x128xf32>, vector<1x128xf32> -> vector<1x128xf32>
    %109 = arith.addf %107, %108 : vector<1x128xf32>
    %110 = math.tanh %109 : vector<1x128xf32>
    %111 = arith.mulf %3, %110 : vector<1x128xf32>
    %112 = arith.addf %111, %4 : vector<1x128xf32>
    %113 = vector.extract_strided_slice %112 {offsets = [0, 0], sizes = [1, 32], strides = [1, 1]} : vector<1x128xf32> to vector<1x32xf32>
    %114 = vector.extract_strided_slice %112 {offsets = [0, 32], sizes = [1, 32], strides = [1, 1]} : vector<1x128xf32> to vector<1x32xf32>
    %115 = vector.extract_strided_slice %112 {offsets = [0, 64], sizes = [1, 32], strides = [1, 1]} : vector<1x128xf32> to vector<1x32xf32>
    %116 = vector.extract_strided_slice %112 {offsets = [0, 96], sizes = [1, 32], strides = [1, 1]} : vector<1x128xf32> to vector<1x32xf32>
    %117 = arith.mulf %114, %103 : vector<1x32xf32>
    %118 = arith.mulf %113, %116 : vector<1x32xf32>
    %119 = arith.addf %117, %118 : vector<1x32xf32>
    %120 = math.tanh %119 : vector<1x32xf32>
    %121 = arith.mulf %115, %120 : vector<1x32xf32>
    %c6 = arith.constant 6 : index
    %c0_21 = arith.constant 0 : index
    %122 = vector.load %arg4[%c6, %c0_21] : memref<8x32xf32, #tpu.memory_space<vmem>>, vector<1x32xf32>
    tpu.vector_store %arg4[%c6, %c0_21], %121 {strides = array<i32>} : memref<8x32xf32, #tpu.memory_space<vmem>>, vector<1x32xf32>,
    %123 = vector.extract_strided_slice %11 {offsets = [7, 0], sizes = [1, 128], strides = [1, 1]} : vector<8x128xf32> to vector<1x128xf32>
    %cst_22 = arith.constant dense<0.000000e+00> : vector<1x128xf32>
    %124 = tpu.matmul %121, %0, %cst_22 {dimension_numbers = #tpu.dot_dimension_numbers<[1], [0], [0], [1], [0, 0, 1, 1], [], []>} : vector<1x32xf32>, vector<32x128xf32>, vector<1x128xf32> -> vector<1x128xf32>
    %125 = arith.addf %123, %124 : vector<1x128xf32>
    %126 = math.tanh %125 : vector<1x128xf32>
    %127 = arith.mulf %3, %126 : vector<1x128xf32>
    %128 = arith.addf %127, %4 : vector<1x128xf32>
    %129 = vector.extract_strided_slice %128 {offsets = [0, 0], sizes = [1, 32], strides = [1, 1]} : vector<1x128xf32> to vector<1x32xf32>
    %130 = vector.extract_strided_slice %128 {offsets = [0, 32], sizes = [1, 32], strides = [1, 1]} : vector<1x128xf32> to vector<1x32xf32>
    %131 = vector.extract_strided_slice %128 {offsets = [0, 64], sizes = [1, 32], strides = [1, 1]} : vector<1x128xf32> to vector<1x32xf32>
    %132 = vector.extract_strided_slice %128 {offsets = [0, 96], sizes = [1, 32], strides = [1, 1]} : vector<1x128xf32> to vector<1x32xf32>
    %133 = arith.mulf %130, %119 : vector<1x32xf32>
    %134 = arith.mulf %129, %132 : vector<1x32xf32>
    %135 = arith.addf %133, %134 : vector<1x32xf32>
    %136 = math.tanh %135 : vector<1x32xf32>
    %137 = arith.mulf %131, %136 : vector<1x32xf32>
    %c7 = arith.constant 7 : index
    %c0_23 = arith.constant 0 : index
    %138 = vector.load %arg4[%c7, %c0_23] : memref<8x32xf32, #tpu.memory_space<vmem>>, vector<1x32xf32>
    tpu.vector_store %arg4[%c7, %c0_23], %137 {strides = array<i32>} : memref<8x32xf32, #tpu.memory_space<vmem>>, vector<1x32xf32>,
    %c0_24 = arith.constant 0 : index
    %c0_25 = arith.constant 0 : index
    %139 = vector.load %arg4[%c0_24, %c0_25] : memref<8x32xf32, #tpu.memory_space<vmem>>, vector<8x32xf32>
    %140 = vector.broadcast %5 : vector<1x32xf32> to vector<8x32xf32>
    %141 = arith.mulf %139, %140 : vector<8x32xf32>
    %cst_26 = arith.constant dense<0.000000e+00> : vector<8xf32>
    %142 = vector.multi_reduction <add>, %141, %cst_26 [1] : vector<8x32xf32> to vector<8xf32>
    %143 = vector.shape_cast %142 : vector<8xf32> to vector<8x1xf32>
    %c0_27 = arith.constant 0 : index
    %144 = memref.load %arg2[%c0_27] : memref<1xf32, #tpu.memory_space<smem>>
    %145 = vector.broadcast %144 : f32 to vector<8x1xf32>
    %146 = arith.addf %143, %145 : vector<8x1xf32>
    %c0_28 = arith.constant 0 : index
    %c0_29 = arith.constant 0 : index
    %147 = vector.load %arg3[%c0_28, %c0_29] : memref<8x1xf32, #tpu.memory_space<vmem>>, vector<8x1xf32>
    tpu.vector_store %arg3[%c0_28, %c0_29], %146 {strides = array<i32>} : memref<8x1xf32, #tpu.memory_space<vmem>>, vector<8x1xf32>,
    return
  }
}

</mosaic_0001>

<llo_original>
// kernel: tpu_custom_call.1
$region0: #{tpu_custom_call.1}
  #allocation0 [shape = 'u32[]', space=smem, size = 0x4, offset = 0x4, fixed_abs, tag = 'smem constant byte address 0x4 - core index']
  #allocation1 [shape = 'u32[144,128]{1,0:T(1,128)}', space=vmem, size = 0x12000, scoped, tag = 'internal scratch']
  #allocation2 [shape = 'f32[8,32]{1,0:T(8,128)}', space=vmem, size = 0x1000, scoped, tag = 'scratch operand']
  #allocation3 [shape = 'f32[1]{0:T(128)S(6)}', space=smem, size = 0x200, scoped, tag = 'scoped memory for tpu_custom_call.1']
  %s0 = inlined_call_operand.vmem [shape: f32[8,1], index: 0, kind: input, shape index: {}]
  %s1 = inlined_call_operand.hbm [shape: f32[40,128], index: 1, kind: input, shape index: {}]
  %s2 = inlined_call_operand.<no memory space> [shape: f32[1], index: 2, kind: input, shape index: {}]
  %s3 = inlined_call_operand.vmem [shape: f32[8,1], index: 3, kind: output, shape index: {}]
  %s4 = sld [smem:[#allocation0]]
  $region26: #{tpu_custom_call.1} parent=0
    _
  %s6 = ssub.s32 1, %s4
  %s7 = scalar_select 0, %s6, %s4
  %8 = sst [smem:[#allocation3]] %s2
  $region1: #{tpu_custom_call.1} parent=0
    #allocation4 [shape = 'u8[20480]{0}', space=vmem, size = 0x5000, scoped, tag = 'input window, operand 1, single buffered']
    #allocation5 [shape = 's32[1]{0}', space=sflag, size = 0x4, scoped, tag = 'scoped memory for tpu_custom_call.1']
    %9 = vsyncpa [#allocation5], 0
    // Predicated region
    $region2: #{tpu_custom_call.1} parent=1 // pred_check
      _
    $region3: #{tpu_custom_call.1} parent=1 // pred_check_branch
      %11 = sbr.rel (0) target = $region5
    $region4: #{tpu_custom_call.1} parent=1 // pred_region
      _
    $region5: #{tpu_custom_call.1} parent=1 // pred_fallthru
      _
    // Predicated region
    $region6: #{tpu_custom_call.1} parent=1 // pred_check
      _
    $region7: #{tpu_custom_call.1} parent=1 // pred_check_branch
      %13 = sbr.rel (0) target = $region9
    $region8: #{tpu_custom_call.1} parent=1 // pred_region
      %s15 = ssub.s32 640, 640
      %16 = vsyncadd [#allocation5], %s15
      %s17 = sshll.u32 [#allocation4], 4
      %s18 = int_to_ptr.vmem [resolvable:$true] %s17
      %23 = dma.hbm_to_vmem [thread:$0]  %s1, 640, %s18, [#allocation5], 128, 128, 8
    $region9: #{tpu_custom_call.1} parent=1 // pred_fallthru
      _
    // Predicated region
    $region10: #{tpu_custom_call.1} parent=1 // pred_check
      _
    $region11: #{tpu_custom_call.1} parent=1 // pred_check_branch
      %25 = sbr.rel (0) target = $region13
    $region12: #{tpu_custom_call.1} parent=1 // pred_region
      _
    $region13: #{tpu_custom_call.1} parent=1 // pred_fallthru
      _
    // Predicated region
    $region14: #{tpu_custom_call.1} parent=1 // pred_check
      _
    $region15: #{tpu_custom_call.1} parent=1 // pred_check_branch
      %27 = sbr.rel (0) target = $region17
    $region16: #{tpu_custom_call.1} parent=1 // pred_region
      %28 = dma.done [#allocation5], 640
    $region17: #{tpu_custom_call.1} parent=1 // pred_fallthru
      _
    %v29 = vld [vmem:[#allocation4] sm:$0xff]
    %v30 = vld [vmem:[#allocation4 + $0x8] sm:$0xff]
    %v31 = vld [vmem:[#allocation4 + $0x10] sm:$0xff]
    %v32 = vld [vmem:[#allocation4 + $0x18] sm:$0xff]
    %v33 = vld [vmem:[#allocation4 + $0x20] sm:$0x1]
    %v34 = vld [vmem:[#allocation4 + $0x21] sm:$0x1]
    %v35 = vld [vmem:[#allocation4 + $0x22] sm:$0x1]
    %v36 = vld [vmem:[#allocation4 + $0x23] sm:$0x1]
    %v37 = vld [vmem:[#allocation4 + $0x24] sm:$0x1]
    %v38 = vld [vmem:[%s0] sm:$0xff]
    %40 = vset.pattern.permute.xlu0 0
    %41 = vperm.xlu0 %40, %v38
    %v42 = vpop.permute.xlu0 %41
    %v44 = vlaneseq
    %v45 = vshrl.u32 %v44, 7
    %v46 = vsub.s32 0, %v45
    %v47 = vrot.slane %v33, %v46
    %v48 = vmul.f32 %v42, %v47
    %v49 = vlaneseq
    %v50 = vshrl.u32 %v49, 7
    %v51 = vsub.s32 0, %v50
    %v52 = vrot.slane %v34, %v51
    %v53 = vadd.f32 %v48, %v52
    %v54 = vtanh.pop %v53
    %v55 = vmul.f32 %v35, %v54
    %v56 = vadd.f32 %v55, %v36
    %v57 = vmul.f32 %v56, 0.0
    %59 = vrot.lane.b32.xlu0 %v56, 32
    %v60 = vpop.permute.xlu0 %59
    %v62 = vmul.f32 %v56, %v60
    %64 = vrot.lane.b32.xlu0 %v62, 32
    %v65 = vpop.permute.xlu0 %64
    %v67 = vadd.f32 %v57, %v65
    %v68 = vtanh.pop %v67
    %70 = vrot.lane.b32.xlu0 %v68, 32
    %v71 = vpop.permute.xlu0 %70
    %v73 = vmul.f32 %v56, %v71
    %75 = vrot.lane.b32.xlu0 %v73, 64
    %v76 = vpop.permute.xlu0 %75
    %vm78 = vcmask 253952
    %79 = vst.msk [vmem:[#allocation2] sm:$0x1] %vm78, %v76
    %vm80 = vcmask 261120
    %v81 = vsel %vm80, %v76, 0
    %83 = vmatprep.subr.mxu0 0.0
    %84 = vmatpush1.msra.mxu0 %v29
    %85 = vmatprep.subr.mxu0 0.0
    %86 = vmatpush1.msra.mxu0 %v30
    %87 = vmatprep.subr.mxu0 0.0
    %88 = vmatpush1.msra.mxu0 %v31
    %89 = vmatprep.subr.mxu0 0.0
    %90 = vmatpush1.msra.mxu0 %v32
    %91 = vmatprep.subr.mxu0 0.0
    %92 = vmatpush1.msra.mxu0 0.0
    %93 = vmatprep.subr.mxu0 0.0
    %94 = vmatpush1.msra.mxu0 0.0
    %95 = vmatprep.subr.mxu0 0.0
    %96 = vmatpush1.msra.mxu0 0.0
    %97 = vmatprep.subr.mxu0 0.0
    %98 = vmatpush1.msra.mxu0 0.0
    %99 = vmatprep.subr.mxu0 0.0
    %100 = vmatpush1.msra.mxu0 0.0
    %101 = vmatprep.subr.mxu0 0.0
    %102 = vmatpush1.msra.mxu0 0.0
    %103 = vmatprep.subr.mxu0 0.0
    %104 = vmatpush1.msra.mxu0 0.0
    %105 = vmatprep.subr.mxu0 0.0
    %106 = vmatpush1.msra.mxu0 0.0
    %107 = vmatprep.subr.mxu0 0.0
    %108 = vmatpush1.msra.mxu0 0.0
    %109 = vmatprep.subr.mxu0 0.0
    %110 = vmatpush1.msra.mxu0 0.0
    %111 = vmatprep.subr.mxu0 0.0
    %112 = vmatpush1.msra.mxu0 0.0
    %113 = vmatprep.subr.mxu0 0.0
    %114 = vmatpush1.msra.mxu0 0.0
    %115 = vmatprep.subr.mxu0 0.0
    %116 = vmatpush1.msra.mxu0 0.0
    %117 = vmatprep.subr.mxu0 0.0
    %118 = vmatpush1.msra.mxu0 0.0
    %119 = vmatprep.subr.mxu0 0.0
    %120 = vmatpush1.msra.mxu0 0.0
    %121 = vmatprep.subr.mxu0 0.0
    %122 = vmatpush1.msra.mxu0 0.0
    %123 = vmatprep.subr.mxu0 0.0
    %124 = vmatpush1.msra.mxu0 0.0
    %125 = vmatprep.subr.mxu0 0.0
    %126 = vmatpush1.msra.mxu0 0.0
    %127 = vmatprep.subr.mxu0 0.0
    %128 = vmatpush1.msra.mxu0 0.0
    %129 = vmatprep.subr.mxu0 0.0
    %130 = vmatpush1.msra.mxu0 0.0
    %131 = vmatprep.subr.mxu0 0.0
    %132 = vmatpush1.msra.mxu0 0.0
    %133 = vmatprep.subr.mxu0 0.0
    %134 = vmatpush1.msra.mxu0 0.0
    %135 = vmatprep.subr.mxu0 0.0
    %136 = vmatpush1.msra.mxu0 0.0
    %137 = vmatprep.subr.mxu0 0.0
    %138 = vmatpush1.msra.mxu0 0.0
    %139 = vmatprep.subr.mxu0 0.0
    %140 = vmatpush1.msra.mxu0 0.0
    %141 = vmatprep.subr.mxu0 0.0
    %142 = vmatpush1.msra.mxu0 0.0
    %143 = vmatprep.subr.mxu0 0.0
    %144 = vmatpush1.msra.mxu0 0.0
    %145 = vmatprep.subr.mxu0 0.0
    %146 = vmatpush1.msra.mxu0 0.0
    %147 = vmatprep.mubr.f32.mxu0 0.0
    %148 = vmatmul.mubr.f32.gmra.mrb[0].mxu0 %v81
    %v149 = vpop.f32.mrb[0].mxu0
    %v150 = vadd.f32 0.0, %v149
    %v151 = vpop.f32.mrb[0].mxu0
    %152 = vdwg.mxu0
    %v154 = vrot.slane %v150, 7
    %v156 = vadd.f32 %v53, %v154
    %v157 = vtanh.pop %v156
    %v159 = vrot.slane %v157, 1
    %v161 = vmul.f32 %v35, %v159
    %v162 = vadd.f32 %v161, %v36
    %v163 = vmul.f32 %v162, %v67
    %165 = vrot.lane.b32.xlu0 %v162, 32
    %v166 = vpop.permute.xlu0 %165
    %v168 = vmul.f32 %v162, %v166
    %170 = vrot.lane.b32.xlu0 %v168, 32
    %v171 = vpop.permute.xlu0 %170
    %v173 = vadd.f32 %v163, %v171
    %v174 = vtanh.pop %v173
    %176 = vrot.lane.b32.xlu0 %v174, 32
    %v177 = vpop.permute.xlu0 %176
    %v179 = vmul.f32 %v162, %v177
    %181 = vrot.lane.b32.xlu0 %v179, 64
    %v182 = vpop.permute.xlu0 %181
    %184 = vst.msk [vmem:[#allocation2 + $0x1] sm:$0x1] %vm78, %v182
    %v185 = vsel %vm80, %v182, 0
    %187 = vmatprep.subr.mxu0 0.0
    %188 = vmatpush1.msra.mxu0 %v29
    %189 = vmatprep.subr.mxu0 0.0
    %190 = vmatpush1.msra.mxu0 %v30
    %191 = vmatprep.subr.mxu0 0.0
    %192 = vmatpush1.msra.mxu0 %v31
    %193 = vmatprep.subr.mxu0 0.0
    %194 = vmatpush1.msra.mxu0 %v32
    %195 = vmatprep.subr.mxu0 0.0
    %196 = vmatpush1.msra.mxu0 0.0
    %197 = vmatprep.subr.mxu0 0.0
    %198 = vmatpush1.msra.mxu0 0.0
    %199 = vmatprep.subr.mxu0 0.0
    %200 = vmatpush1.msra.mxu0 0.0
    %201 = vmatprep.subr.mxu0 0.0
    %202 = vmatpush1.msra.mxu0 0.0
    %203 = vmatprep.subr.mxu0 0.0
    %204 = vmatpush1.msra.mxu0 0.0
    %205 = vmatprep.subr.mxu0 0.0
    %206 = vmatpush1.msra.mxu0 0.0
    %207 = vmatprep.subr.mxu0 0.0
    %208 = vmatpush1.msra.mxu0 0.0
    %209 = vmatprep.subr.mxu0 0.0
    %210 = vmatpush1.msra.mxu0 0.0
    %211 = vmatprep.subr.mxu0 0.0
    %212 = vmatpush1.msra.mxu0 0.0
    %213 = vmatprep.subr.mxu0 0.0
    %214 = vmatpush1.msra.mxu0 0.0
    %215 = vmatprep.subr.mxu0 0.0
    %216 = vmatpush1.msra.mxu0 0.0
    %217 = vmatprep.subr.mxu0 0.0
    %218 = vmatpush1.msra.mxu0 0.0
    %219 = vmatprep.subr.mxu0 0.0
    %220 = vmatpush1.msra.mxu0 0.0
    %221 = vmatprep.subr.mxu0 0.0
    %222 = vmatpush1.msra.mxu0 0.0
    %223 = vmatprep.subr.mxu0 0.0
    %224 = vmatpush1.msra.mxu0 0.0
    %225 = vmatprep.subr.mxu0 0.0
    %226 = vmatpush1.msra.mxu0 0.0
    %227 = vmatprep.subr.mxu0 0.0
    %228 = vmatpush1.msra.mxu0 0.0
    %229 = vmatprep.subr.mxu0 0.0
    %230 = vmatpush1.msra.mxu0 0.0
    %231 = vmatprep.subr.mxu0 0.0
    %232 = vmatpush1.msra.mxu0 0.0
    %233 = vmatprep.subr.mxu0 0.0
    %234 = vmatpush1.msra.mxu0 0.0
    %235 = vmatprep.subr.mxu0 0.0
    %236 = vmatpush1.msra.mxu0 0.0
    %237 = vmatprep.subr.mxu0 0.0
    %238 = vmatpush1.msra.mxu0 0.0
    %239 = vmatprep.subr.mxu0 0.0
    %240 = vmatpush1.msra.mxu0 0.0
    %241 = vmatprep.subr.mxu0 0.0
    %242 = vmatpush1.msra.mxu0 0.0
    %243 = vmatprep.subr.mxu0 0.0
    %244 = vmatpush1.msra.mxu0 0.0
    %245 = vmatprep.subr.mxu0 0.0
    %246 = vmatpush1.msra.mxu0 0.0
    %247 = vmatprep.subr.mxu0 0.0
    %248 = vmatpush1.msra.mxu0 0.0
    %249 = vmatprep.subr.mxu0 0.0
    %250 = vmatpush1.msra.mxu0 0.0
    %251 = vmatprep.mubr.f32.mxu0 0.0
    %252 = vmatmul.mubr.f32.gmra.mrb[0].mxu0 %v185
    %v253 = vpop.f32.mrb[0].mxu0
    %v254 = vadd.f32 0.0, %v253
    %v255 = vpop.f32.mrb[0].mxu0
    %256 = vdwg.mxu0
    %v258 = vrot.slane %v254, 6
    %v260 = vadd.f32 %v53, %v258
    %v261 = vtanh.pop %v260
    %v263 = vrot.slane %v261, 2
    %v265 = vmul.f32 %v35, %v263
    %v266 = vadd.f32 %v265, %v36
    %v267 = vmul.f32 %v266, %v173
    %269 = vrot.lane.b32.xlu0 %v266, 32
    %v270 = vpop.permute.xlu0 %269
    %v272 = vmul.f32 %v266, %v270
    %274 = vrot.lane.b32.xlu0 %v272, 32
    %v275 = vpop.permute.xlu0 %274
    %v277 = vadd.f32 %v267, %v275
    %v278 = vtanh.pop %v277
    %280 = vrot.lane.b32.xlu0 %v278, 32
    %v281 = vpop.permute.xlu0 %280
    %v283 = vmul.f32 %v266, %v281
    %285 = vrot.lane.b32.xlu0 %v283, 64
    %v286 = vpop.permute.xlu0 %285
    %288 = vst.msk [vmem:[#allocation2 + $0x2] sm:$0x1] %vm78, %v286
    %v289 = vsel %vm80, %v286, 0
    %291 = vmatprep.subr.mxu0 0.0
    %292 = vmatpush1.msra.mxu0 %v29
    %293 = vmatprep.subr.mxu0 0.0
    %294 = vmatpush1.msra.mxu0 %v30
    %295 = vmatprep.subr.mxu0 0.0
    %296 = vmatpush1.msra.mxu0 %v31
    %297 = vmatprep.subr.mxu0 0.0
    %298 = vmatpush1.msra.mxu0 %v32
    %299 = vmatprep.subr.mxu0 0.0
    %300 = vmatpush1.msra.mxu0 0.0
    %301 = vmatprep.subr.mxu0 0.0
    %302 = vmatpush1.msra.mxu0 0.0
    %303 = vmatprep.subr.mxu0 0.0
    %304 = vmatpush1.msra.mxu0 0.0
    %305 = vmatprep.subr.mxu0 0.0
    %306 = vmatpush1.msra.mxu0 0.0
    %307 = vmatprep.subr.mxu0 0.0
    %308 = vmatpush1.msra.mxu0 0.0
    %309 = vmatprep.subr.mxu0 0.0
    %310 = vmatpush1.msra.mxu0 0.0
    %311 = vmatprep.subr.mxu0 0.0
    %312 = vmatpush1.msra.mxu0 0.0
    %313 = vmatprep.subr.mxu0 0.0
    %314 = vmatpush1.msra.mxu0 0.0
    %315 = vmatprep.subr.mxu0 0.0
    %316 = vmatpush1.msra.mxu0 0.0
    %317 = vmatprep.subr.mxu0 0.0
    %318 = vmatpush1.msra.mxu0 0.0
    %319 = vmatprep.subr.mxu0 0.0
    %320 = vmatpush1.msra.mxu0 0.0
    %321 = vmatprep.subr.mxu0 0.0
    %322 = vmatpush1.msra.mxu0 0.0
    %323 = vmatprep.subr.mxu0 0.0
    %324 = vmatpush1.msra.mxu0 0.0
    %325 = vmatprep.subr.mxu0 0.0
    %326 = vmatpush1.msra.mxu0 0.0
    %327 = vmatprep.subr.mxu0 0.0
    %328 = vmatpush1.msra.mxu0 0.0
    %329 = vmatprep.subr.mxu0 0.0
    %330 = vmatpush1.msra.mxu0 0.0
    %331 = vmatprep.subr.mxu0 0.0
    %332 = vmatpush1.msra.mxu0 0.0
    %333 = vmatprep.subr.mxu0 0.0
    %334 = vmatpush1.msra.mxu0 0.0
    %335 = vmatprep.subr.mxu0 0.0
    %336 = vmatpush1.msra.mxu0 0.0
    %337 = vmatprep.subr.mxu0 0.0
    %338 = vmatpush1.msra.mxu0 0.0
    %339 = vmatprep.subr.mxu0 0.0
    %340 = vmatpush1.msra.mxu0 0.0
    %341 = vmatprep.subr.mxu0 0.0
    %342 = vmatpush1.msra.mxu0 0.0
    %343 = vmatprep.subr.mxu0 0.0
    %344 = vmatpush1.msra.mxu0 0.0
    %345 = vmatprep.subr.mxu0 0.0
    %346 = vmatpush1.msra.mxu0 0.0
    %347 = vmatprep.subr.mxu0 0.0
    %348 = vmatpush1.msra.mxu0 0.0
    %349 = vmatprep.subr.mxu0 0.0
    %350 = vmatpush1.msra.mxu0 0.0
    %351 = vmatprep.subr.mxu0 0.0
    %352 = vmatpush1.msra.mxu0 0.0
    %353 = vmatprep.subr.mxu0 0.0
    %354 = vmatpush1.msra.mxu0 0.0
    %355 = vmatprep.mubr.f32.mxu0 0.0
    %356 = vmatmul.mubr.f32.gmra.mrb[0].mxu0 %v289
    %v357 = vpop.f32.mrb[0].mxu0
    %v358 = vadd.f32 0.0, %v357
    %v359 = vpop.f32.mrb[0].mxu0
    %360 = vdwg.mxu0
    %v362 = vrot.slane %v358, 5
    %v364 = vadd.f32 %v53, %v362
    %v365 = vtanh.pop %v364
    %v367 = vrot.slane %v365, 3
    %v369 = vmul.f32 %v35, %v367
    %v370 = vadd.f32 %v369, %v36
    %v371 = vmul.f32 %v370, %v277
    %373 = vrot.lane.b32.xlu0 %v370, 32
    %v374 = vpop.permute.xlu0 %373
    %v376 = vmul.f32 %v370, %v374
    %378 = vrot.lane.b32.xlu0 %v376, 32
    %v379 = vpop.permute.xlu0 %378
    %v381 = vadd.f32 %v371, %v379
    %v382 = vtanh.pop %v381
    %384 = vrot.lane.b32.xlu0 %v382, 32
    %v385 = vpop.permute.xlu0 %384
    %v387 = vmul.f32 %v370, %v385
    %389 = vrot.lane.b32.xlu0 %v387, 64
    %v390 = vpop.permute.xlu0 %389
    %392 = vst.msk [vmem:[#allocation2 + $0x3] sm:$0x1] %vm78, %v390
    %v393 = vsel %vm80, %v390, 0
    %395 = vmatprep.subr.mxu0 0.0
    %396 = vmatpush1.msra.mxu0 %v29
    %397 = vmatprep.subr.mxu0 0.0
    %398 = vmatpush1.msra.mxu0 %v30
    %399 = vmatprep.subr.mxu0 0.0
    %400 = vmatpush1.msra.mxu0 %v31
    %401 = vmatprep.subr.mxu0 0.0
    %402 = vmatpush1.msra.mxu0 %v32
    %403 = vmatprep.subr.mxu0 0.0
    %404 = vmatpush1.msra.mxu0 0.0
    %405 = vmatprep.subr.mxu0 0.0
    %406 = vmatpush1.msra.mxu0 0.0
    %407 = vmatprep.subr.mxu0 0.0
    %408 = vmatpush1.msra.mxu0 0.0
    %409 = vmatprep.subr.mxu0 0.0
    %410 = vmatpush1.msra.mxu0 0.0
    %411 = vmatprep.subr.mxu0 0.0
    %412 = vmatpush1.msra.mxu0 0.0
    %413 = vmatprep.subr.mxu0 0.0
    %414 = vmatpush1.msra.mxu0 0.0
    %415 = vmatprep.subr.mxu0 0.0
    %416 = vmatpush1.msra.mxu0 0.0
    %417 = vmatprep.subr.mxu0 0.0
    %418 = vmatpush1.msra.mxu0 0.0
    %419 = vmatprep.subr.mxu0 0.0
    %420 = vmatpush1.msra.mxu0 0.0
    %421 = vmatprep.subr.mxu0 0.0
    %422 = vmatpush1.msra.mxu0 0.0
    %423 = vmatprep.subr.mxu0 0.0
    %424 = vmatpush1.msra.mxu0 0.0
    %425 = vmatprep.subr.mxu0 0.0
    %426 = vmatpush1.msra.mxu0 0.0
    %427 = vmatprep.subr.mxu0 0.0
    %428 = vmatpush1.msra.mxu0 0.0
    %429 = vmatprep.subr.mxu0 0.0
    %430 = vmatpush1.msra.mxu0 0.0
    %431 = vmatprep.subr.mxu0 0.0
    %432 = vmatpush1.msra.mxu0 0.0
    %433 = vmatprep.subr.mxu0 0.0
    %434 = vmatpush1.msra.mxu0 0.0
    %435 = vmatprep.subr.mxu0 0.0
    %436 = vmatpush1.msra.mxu0 0.0
    %437 = vmatprep.subr.mxu0 0.0
    %438 = vmatpush1.msra.mxu0 0.0
    %439 = vmatprep.subr.mxu0 0.0
    %440 = vmatpush1.msra.mxu0 0.0
    %441 = vmatprep.subr.mxu0 0.0
    %442 = vmatpush1.msra.mxu0 0.0
    %443 = vmatprep.subr.mxu0 0.0
    %444 = vmatpush1.msra.mxu0 0.0
    %445 = vmatprep.subr.mxu0 0.0
    %446 = vmatpush1.msra.mxu0 0.0
    %447 = vmatprep.subr.mxu0 0.0
    %448 = vmatpush1.msra.mxu0 0.0
    %449 = vmatprep.subr.mxu0 0.0
    %450 = vmatpush1.msra.mxu0 0.0
    %451 = vmatprep.subr.mxu0 0.0
    %452 = vmatpush1.msra.mxu0 0.0
    %453 = vmatprep.subr.mxu0 0.0
    %454 = vmatpush1.msra.mxu0 0.0
    %455 = vmatprep.subr.mxu0 0.0
    %456 = vmatpush1.msra.mxu0 0.0
    %457 = vmatprep.subr.mxu0 0.0
    %458 = vmatpush1.msra.mxu0 0.0
    %459 = vmatprep.mubr.f32.mxu0 0.0
    %460 = vmatmul.mubr.f32.gmra.mrb[0].mxu0 %v393
    %v461 = vpop.f32.mrb[0].mxu0
    %v462 = vadd.f32 0.0, %v461
    %v463 = vpop.f32.mrb[0].mxu0
    %464 = vdwg.mxu0
    %v466 = vrot.slane %v462, 4
    %v468 = vadd.f32 %v53, %v466
    %v469 = vtanh.pop %v468
    %v471 = vrot.slane %v469, 4
    %v473 = vmul.f32 %v35, %v471
    %v474 = vadd.f32 %v473, %v36
    %v475 = vmul.f32 %v474, %v381
    %477 = vrot.lane.b32.xlu0 %v474, 32
    %v478 = vpop.permute.xlu0 %477
    %v480 = vmul.f32 %v474, %v478
    %482 = vrot.lane.b32.xlu0 %v480, 32
    %v483 = vpop.permute.xlu0 %482
    %v485 = vadd.f32 %v475, %v483
    %v486 = vtanh.pop %v485
    %488 = vrot.lane.b32.xlu0 %v486, 32
    %v489 = vpop.permute.xlu0 %488
    %v491 = vmul.f32 %v474, %v489
    %493 = vrot.lane.b32.xlu0 %v491, 64
    %v494 = vpop.permute.xlu0 %493
    %496 = vst.msk [vmem:[#allocation2 + $0x4] sm:$0x1] %vm78, %v494
    %v497 = vsel %vm80, %v494, 0
    %499 = vmatprep.subr.mxu0 0.0
    %500 = vmatpush1.msra.mxu0 %v29
    %501 = vmatprep.subr.mxu0 0.0
    %502 = vmatpush1.msra.mxu0 %v30
    %503 = vmatprep.subr.mxu0 0.0
    %504 = vmatpush1.msra.mxu0 %v31
    %505 = vmatprep.subr.mxu0 0.0
    %506 = vmatpush1.msra.mxu0 %v32
    %507 = vmatprep.subr.mxu0 0.0
    %508 = vmatpush1.msra.mxu0 0.0
    %509 = vmatprep.subr.mxu0 0.0
    %510 = vmatpush1.msra.mxu0 0.0
    %511 = vmatprep.subr.mxu0 0.0
    %512 = vmatpush1.msra.mxu0 0.0
    %513 = vmatprep.subr.mxu0 0.0
    %514 = vmatpush1.msra.mxu0 0.0
    %515 = vmatprep.subr.mxu0 0.0
    %516 = vmatpush1.msra.mxu0 0.0
    %517 = vmatprep.subr.mxu0 0.0
    %518 = vmatpush1.msra.mxu0 0.0
    %519 = vmatprep.subr.mxu0 0.0
    %520 = vmatpush1.msra.mxu0 0.0
    %521 = vmatprep.subr.mxu0 0.0
    %522 = vmatpush1.msra.mxu0 0.0
    %523 = vmatprep.subr.mxu0 0.0
    %524 = vmatpush1.msra.mxu0 0.0
    %525 = vmatprep.subr.mxu0 0.0
    %526 = vmatpush1.msra.mxu0 0.0
    %527 = vmatprep.subr.mxu0 0.0
    %528 = vmatpush1.msra.mxu0 0.0
    %529 = vmatprep.subr.mxu0 0.0
    %530 = vmatpush1.msra.mxu0 0.0
    %531 = vmatprep.subr.mxu0 0.0
    %532 = vmatpush1.msra.mxu0 0.0
    %533 = vmatprep.subr.mxu0 0.0
    %534 = vmatpush1.msra.mxu0 0.0
    %535 = vmatprep.subr.mxu0 0.0
    %536 = vmatpush1.msra.mxu0 0.0
    %537 = vmatprep.subr.mxu0 0.0
    %538 = vmatpush1.msra.mxu0 0.0
    %539 = vmatprep.subr.mxu0 0.0
    %540 = vmatpush1.msra.mxu0 0.0
    %541 = vmatprep.subr.mxu0 0.0
    %542 = vmatpush1.msra.mxu0 0.0
    %543 = vmatprep.subr.mxu0 0.0
    %544 = vmatpush1.msra.mxu0 0.0
    %545 = vmatprep.subr.mxu0 0.0
    %546 = vmatpush1.msra.mxu0 0.0
    %547 = vmatprep.subr.mxu0 0.0
    %548 = vmatpush1.msra.mxu0 0.0
    %549 = vmatprep.subr.mxu0 0.0
    %550 = vmatpush1.msra.mxu0 0.0
    %551 = vmatprep.subr.mxu0 0.0
    %552 = vmatpush1.msra.mxu0 0.0
    %553 = vmatprep.subr.mxu0 0.0
    %554 = vmatpush1.msra.mxu0 0.0
    %555 = vmatprep.subr.mxu0 0.0
    %556 = vmatpush1.msra.mxu0 0.0
    %557 = vmatprep.subr.mxu0 0.0
    %558 = vmatpush1.msra.mxu0 0.0
    %559 = vmatprep.subr.mxu0 0.0
    %560 = vmatpush1.msra.mxu0 0.0
    %561 = vmatprep.subr.mxu0 0.0
    %562 = vmatpush1.msra.mxu0 0.0
    %563 = vmatprep.mubr.f32.mxu0 0.0
    %564 = vmatmul.mubr.f32.gmra.mrb[0].mxu0 %v497
    %v565 = vpop.f32.mrb[0].mxu0
    %v566 = vadd.f32 0.0, %v565
    %v567 = vpop.f32.mrb[0].mxu0
    %568 = vdwg.mxu0
    %v570 = vrot.slane %v566, 3
    %v572 = vadd.f32 %v53, %v570
    %v573 = vtanh.pop %v572
    %v575 = vrot.slane %v573, 5
    %v577 = vmul.f32 %v35, %v575
    %v578 = vadd.f32 %v577, %v36
    %v579 = vmul.f32 %v578, %v485
    %581 = vrot.lane.b32.xlu0 %v578, 32
    %v582 = vpop.permute.xlu0 %581
    %v584 = vmul.f32 %v578, %v582
    %586 = vrot.lane.b32.xlu0 %v584, 32
    %v587 = vpop.permute.xlu0 %586
    %v589 = vadd.f32 %v579, %v587
    %v590 = vtanh.pop %v589
    %592 = vrot.lane.b32.xlu0 %v590, 32
    %v593 = vpop.permute.xlu0 %592
    %v595 = vmul.f32 %v578, %v593
    %597 = vrot.lane.b32.xlu0 %v595, 64
    %v598 = vpop.permute.xlu0 %597
    %600 = vst.msk [vmem:[#allocation2 + $0x5] sm:$0x1] %vm78, %v598
    %v601 = vsel %vm80, %v598, 0
    %603 = vmatprep.subr.mxu0 0.0
    %604 = vmatpush1.msra.mxu0 %v29
    %605 = vmatprep.subr.mxu0 0.0
    %606 = vmatpush1.msra.mxu0 %v30
    %607 = vmatprep.subr.mxu0 0.0
    %608 = vmatpush1.msra.mxu0 %v31
    %609 = vmatprep.subr.mxu0 0.0
    %610 = vmatpush1.msra.mxu0 %v32
    %611 = vmatprep.subr.mxu0 0.0
    %612 = vmatpush1.msra.mxu0 0.0
    %613 = vmatprep.subr.mxu0 0.0
    %614 = vmatpush1.msra.mxu0 0.0
    %615 = vmatprep.subr.mxu0 0.0
    %616 = vmatpush1.msra.mxu0 0.0
    %617 = vmatprep.subr.mxu0 0.0
    %618 = vmatpush1.msra.mxu0 0.0
    %619 = vmatprep.subr.mxu0 0.0
    %620 = vmatpush1.msra.mxu0 0.0
    %621 = vmatprep.subr.mxu0 0.0
    %622 = vmatpush1.msra.mxu0 0.0
    %623 = vmatprep.subr.mxu0 0.0
    %624 = vmatpush1.msra.mxu0 0.0
    %625 = vmatprep.subr.mxu0 0.0
    %626 = vmatpush1.msra.mxu0 0.0
    %627 = vmatprep.subr.mxu0 0.0
    %628 = vmatpush1.msra.mxu0 0.0
    %629 = vmatprep.subr.mxu0 0.0
    %630 = vmatpush1.msra.mxu0 0.0
    %631 = vmatprep.subr.mxu0 0.0
    %632 = vmatpush1.msra.mxu0 0.0
    %633 = vmatprep.subr.mxu0 0.0
    %634 = vmatpush1.msra.mxu0 0.0
    %635 = vmatprep.subr.mxu0 0.0
    %636 = vmatpush1.msra.mxu0 0.0
    %637 = vmatprep.subr.mxu0 0.0
    %638 = vmatpush1.msra.mxu0 0.0
    %639 = vmatprep.subr.mxu0 0.0
    %640 = vmatpush1.msra.mxu0 0.0
    %641 = vmatprep.subr.mxu0 0.0
    %642 = vmatpush1.msra.mxu0 0.0
    %643 = vmatprep.subr.mxu0 0.0
    %644 = vmatpush1.msra.mxu0 0.0
    %645 = vmatprep.subr.mxu0 0.0
    %646 = vmatpush1.msra.mxu0 0.0
    %647 = vmatprep.subr.mxu0 0.0
    %648 = vmatpush1.msra.mxu0 0.0
    %649 = vmatprep.subr.mxu0 0.0
    %650 = vmatpush1.msra.mxu0 0.0
    %651 = vmatprep.subr.mxu0 0.0
    %652 = vmatpush1.msra.mxu0 0.0
    %653 = vmatprep.subr.mxu0 0.0
    %654 = vmatpush1.msra.mxu0 0.0
    %655 = vmatprep.subr.mxu0 0.0
    %656 = vmatpush1.msra.mxu0 0.0
    %657 = vmatprep.subr.mxu0 0.0
    %658 = vmatpush1.msra.mxu0 0.0
    %659 = vmatprep.subr.mxu0 0.0
    %660 = vmatpush1.msra.mxu0 0.0
    %661 = vmatprep.subr.mxu0 0.0
    %662 = vmatpush1.msra.mxu0 0.0
    %663 = vmatprep.subr.mxu0 0.0
    %664 = vmatpush1.msra.mxu0 0.0
    %665 = vmatprep.subr.mxu0 0.0
    %666 = vmatpush1.msra.mxu0 0.0
    %667 = vmatprep.mubr.f32.mxu0 0.0
    %668 = vmatmul.mubr.f32.gmra.mrb[0].mxu0 %v601
    %v669 = vpop.f32.mrb[0].mxu0
    %v670 = vadd.f32 0.0, %v669
    %v671 = vpop.f32.mrb[0].mxu0
    %672 = vdwg.mxu0
    %v674 = vrot.slane %v670, 2
    %v676 = vadd.f32 %v53, %v674
    %v677 = vtanh.pop %v676
    %v679 = vrot.slane %v677, 6
    %v681 = vmul.f32 %v35, %v679
    %v682 = vadd.f32 %v681, %v36
    %v683 = vmul.f32 %v682, %v589
    %685 = vrot.lane.b32.xlu0 %v682, 32
    %v686 = vpop.permute.xlu0 %685
    %v688 = vmul.f32 %v682, %v686
    %690 = vrot.lane.b32.xlu0 %v688, 32
    %v691 = vpop.permute.xlu0 %690
    %v693 = vadd.f32 %v683, %v691
    %v694 = vtanh.pop %v693
    %696 = vrot.lane.b32.xlu0 %v694, 32
    %v697 = vpop.permute.xlu0 %696
    %v699 = vmul.f32 %v682, %v697
    %701 = vrot.lane.b32.xlu0 %v699, 64
    %v702 = vpop.permute.xlu0 %701
    %704 = vst.msk [vmem:[#allocation2 + $0x6] sm:$0x1] %vm78, %v702
    %v705 = vsel %vm80, %v702, 0
    %707 = vmatprep.subr.mxu0 0.0
    %708 = vmatpush1.msra.mxu0 %v29
    %709 = vmatprep.subr.mxu0 0.0
    %710 = vmatpush1.msra.mxu0 %v30
    %711 = vmatprep.subr.mxu0 0.0
    %712 = vmatpush1.msra.mxu0 %v31
    %713 = vmatprep.subr.mxu0 0.0
    %714 = vmatpush1.msra.mxu0 %v32
    %715 = vmatprep.subr.mxu0 0.0
    %716 = vmatpush1.msra.mxu0 0.0
    %717 = vmatprep.subr.mxu0 0.0
    %718 = vmatpush1.msra.mxu0 0.0
    %719 = vmatprep.subr.mxu0 0.0
    %720 = vmatpush1.msra.mxu0 0.0
    %721 = vmatprep.subr.mxu0 0.0
    %722 = vmatpush1.msra.mxu0 0.0
    %723 = vmatprep.subr.mxu0 0.0
    %724 = vmatpush1.msra.mxu0 0.0
    %725 = vmatprep.subr.mxu0 0.0
    %726 = vmatpush1.msra.mxu0 0.0
    %727 = vmatprep.subr.mxu0 0.0
    %728 = vmatpush1.msra.mxu0 0.0
    %729 = vmatprep.subr.mxu0 0.0
    %730 = vmatpush1.msra.mxu0 0.0
    %731 = vmatprep.subr.mxu0 0.0
    %732 = vmatpush1.msra.mxu0 0.0
    %733 = vmatprep.subr.mxu0 0.0
    %734 = vmatpush1.msra.mxu0 0.0
    %735 = vmatprep.subr.mxu0 0.0
    %736 = vmatpush1.msra.mxu0 0.0
    %737 = vmatprep.subr.mxu0 0.0
    %738 = vmatpush1.msra.mxu0 0.0
    %739 = vmatprep.subr.mxu0 0.0
    %740 = vmatpush1.msra.mxu0 0.0
    %741 = vmatprep.subr.mxu0 0.0
    %742 = vmatpush1.msra.mxu0 0.0
    %743 = vmatprep.subr.mxu0 0.0
    %744 = vmatpush1.msra.mxu0 0.0
    %745 = vmatprep.subr.mxu0 0.0
    %746 = vmatpush1.msra.mxu0 0.0
    %747 = vmatprep.subr.mxu0 0.0
    %748 = vmatpush1.msra.mxu0 0.0
    %749 = vmatprep.subr.mxu0 0.0
    %750 = vmatpush1.msra.mxu0 0.0
    %751 = vmatprep.subr.mxu0 0.0
    %752 = vmatpush1.msra.mxu0 0.0
    %753 = vmatprep.subr.mxu0 0.0
    %754 = vmatpush1.msra.mxu0 0.0
    %755 = vmatprep.subr.mxu0 0.0
    %756 = vmatpush1.msra.mxu0 0.0
    %757 = vmatprep.subr.mxu0 0.0
    %758 = vmatpush1.msra.mxu0 0.0
    %759 = vmatprep.subr.mxu0 0.0
    %760 = vmatpush1.msra.mxu0 0.0
    %761 = vmatprep.subr.mxu0 0.0
    %762 = vmatpush1.msra.mxu0 0.0
    %763 = vmatprep.subr.mxu0 0.0
    %764 = vmatpush1.msra.mxu0 0.0
    %765 = vmatprep.subr.mxu0 0.0
    %766 = vmatpush1.msra.mxu0 0.0
    %767 = vmatprep.subr.mxu0 0.0
    %768 = vmatpush1.msra.mxu0 0.0
    %769 = vmatprep.subr.mxu0 0.0
    %770 = vmatpush1.msra.mxu0 0.0
    %771 = vmatprep.mubr.f32.mxu0 0.0
    %772 = vmatmul.mubr.f32.gmra.mrb[0].mxu0 %v705
    %v773 = vpop.f32.mrb[0].mxu0
    %v774 = vadd.f32 0.0, %v773
    %v775 = vpop.f32.mrb[0].mxu0
    %776 = vdwg.mxu0
    %v778 = vrot.slane %v774, 1
    %v780 = vadd.f32 %v53, %v778
    %v781 = vtanh.pop %v780
    %v783 = vrot.slane %v781, 7
    %v785 = vmul.f32 %v35, %v783
    %v786 = vadd.f32 %v785, %v36
    %v787 = vmul.f32 %v786, %v693
    %789 = vrot.lane.b32.xlu0 %v786, 32
    %v790 = vpop.permute.xlu0 %789
    %v792 = vmul.f32 %v786, %v790
    %794 = vrot.lane.b32.xlu0 %v792, 32
    %v795 = vpop.permute.xlu0 %794
    %v797 = vadd.f32 %v787, %v795
    %v798 = vtanh.pop %v797
    %800 = vrot.lane.b32.xlu0 %v798, 32
    %v801 = vpop.permute.xlu0 %800
    %v803 = vmul.f32 %v786, %v801
    %805 = vrot.lane.b32.xlu0 %v803, 64
    %v806 = vpop.permute.xlu0 %805
    %808 = vst.msk [vmem:[#allocation2 + $0x7] sm:$0x1] %vm78, %v806
    %v809 = vld [vmem:[#allocation2] sm:$0xff]
    %v810 = vlaneseq
    %v811 = vshrl.u32 %v810, 7
    %v812 = vsub.s32 0, %v811
    %v813 = vrot.slane %v37, %v812
    %v814 = vmul.f32 %v809, %v813
    %v815 = vsel %vm80, %v814, 0.0
    %816 = vadd.xlane.f32.xlu0 %v815
    %v817 = vpop.xlane.xlu0 %816
    %s818 = sld [smem:[#allocation3]]
    %v819 = vstv %s818
    %v820 = vadd.f32 %v817, %v819
    %vm821 = vcmask 7168
    %822 = vst.msk [vmem:[%s3] sm:$0xff] %vm821, %v820
    // Predicated region
    $region18: #{tpu_custom_call.1} parent=1 // pred_check
      _
    $region19: #{tpu_custom_call.1} parent=1 // pred_check_branch
      %824 = sbr.rel (0) target = $region21
    $region20: #{tpu_custom_call.1} parent=1 // pred_region
      _
    $region21: #{tpu_custom_call.1} parent=1 // pred_fallthru
      _
    // Predicated region
    $region22: #{tpu_custom_call.1} parent=1 // pred_check
      _
    $region23: #{tpu_custom_call.1} parent=1 // pred_check_branch
      %826 = sbr.rel (0) target = $region25
    $region24: #{tpu_custom_call.1} parent=1 // pred_region
      _
    $region25: #{tpu_custom_call.1} parent=1 // pred_fallthru
      _
    %827 = vsyncpa [#allocation5], 1

</llo_original>
